<compile_context>
chip_gen: v7x
topology: tpu7x:2x2x1
jax: 0.10.0
libtpu: 0.0.40
codegen_flags: <defaults>
</compile_context>

<pallas_src>
import functools

import jax
import jax.numpy as jnp
from jax.experimental import pallas as pl
from jax.experimental.pallas import tpu as pltpu


def _round_up(x, m):
    return ((x + m - 1) // m) * m


def _fused_mlp_kernel(*refs, n_layers, bf16_matmul):
    """refs = (x_ref, w1_ref, b1_ref, ..., wL_ref, bL_ref, o_ref).

    Computes h = x; for each layer: h = (ELU if not last)(h @ W + b).
    Intermediate activations never leave on-chip memory.
    """
    x_ref = refs[0]
    o_ref = refs[1 + 2 * n_layers]
    h = x_ref[...]  # f32 (tm, K0_pad)
    for l in range(n_layers):
        w = refs[1 + 2 * l][...]
        b = refs[2 + 2 * l][...]
        if bf16_matmul:
            lhs = h.astype(jnp.bfloat16)
            rhs = w.astype(jnp.bfloat16)
        else:
            lhs, rhs = h, w
        # MXU matmul with f32 accumulation; bias + ELU epilogue kept in f32
        # (v5e VPU/EUP have no bf16 path).
        y = jnp.dot(lhs, rhs, preferred_element_type=jnp.float32)
        y = y + b  # (tm, N_pad) + (1, N_pad) broadcast
        if l != n_layers - 1:
            # ELU, alpha=1.  exp() lowers to the (otherwise idle) EUP; the
            # where() discards the exp branch for y > 0 so no inf propagates.
            y = jnp.where(y > 0, y, jnp.exp(y) - 1.0)
        h = y
    o_ref[...] = h.astype(o_ref.dtype)


def init_mlp_params(key, n_inputs, n_hidden, n_classes):
    """Kaiming-normal weights (nonlinearity='relu'), zero biases.

    Weights stored PyTorch-style (out_features, in_features) -- the reference
    layout of the original module.
    """
    dims = [n_inputs] + list(n_hidden) + [n_classes]
    params = []
    for i in range(len(dims) - 1):
        fan_in, fan_out = dims[i], dims[i + 1]
        key, sub = jax.random.split(key)
        std = (2.0 / fan_in) ** 0.5
        w = std * jax.random.normal(sub, (fan_out, fan_in), dtype=jnp.float32)
        b = jnp.zeros((fan_out,), dtype=jnp.float32)
        params.append((w, b))
    return params


def prepare_params(params, n_inputs):
    """One-time prep OUTSIDE the hot path: transpose (out,in)->(in,out) and
    zero-pad every feature dim up to a multiple of 128 (lane-dense MXU/store).

    Zero padding is exact: padded weight columns produce zero activations,
    ELU(0)=0, and padded weight rows multiply those zeros -- so real outputs
    are unchanged and the wrapper just slices the valid region at the end.
    """
    ws, bs = [], []
    k_pad = _round_up(n_inputs, 128)
    for (w, b) in params:
        n_out, k_in = w.shape
        n_pad = _round_up(n_out, 128)
        wt = jnp.transpose(w)  # (in, out)
        w_p = jnp.zeros((k_pad, n_pad), jnp.float32).at[:k_in, :n_out].set(wt)
        b_p = jnp.zeros((1, n_pad), jnp.float32).at[0, :n_out].set(b)
        ws.append(w_p)
        bs.append(b_p)
        k_pad = n_pad
    return ws, bs


def mlp_pallas_forward(x, ws, bs, *, n_classes, bf16_matmul=False):
    """Fused MLP forward.  x: (B, ...) -> flattened to (B, n_inputs)."""
    n_layers = len(ws)
    B = x.shape[0]
    h = x.reshape(B, -1).astype(jnp.float32)  # x.view(B, -1)

    K0_pad = ws[0].shape[0]
    N_out_pad = ws[-1].shape[1]

    # Pad batch to >=8 sublanes; for big batches use 128-row tiles and a
    # parallel grid so v7x's 2 TensorCores split the work.
    if B <= 128:
        tm = _round_up(max(B, 8), 8)
        B_pad = tm
    else:
        tm = 128
        B_pad = _round_up(B, tm)
    x_pad = jnp.zeros((B_pad, K0_pad), jnp.float32).at[:B, : h.shape[1]].set(h)

    kernel = functools.partial(
        _fused_mlp_kernel, n_layers=n_layers, bf16_matmul=bf16_matmul
    )

    in_specs = [pl.BlockSpec((tm, K0_pad), lambda i: (i, 0))]
    flat_wb = []
    for w, b in zip(ws, bs):
        in_specs.append(pl.BlockSpec(w.shape, lambda i: (0, 0)))  # whole weight, VMEM-resident
        in_specs.append(pl.BlockSpec(b.shape, lambda i: (0, 0)))
        flat_wb.extend((w, b))

    out_pad = pl.pallas_call(
        kernel,
        out_shape=jax.ShapeDtypeStruct((B_pad, N_out_pad), jnp.float32),
        grid=(B_pad // tm,),
        in_specs=in_specs,
        out_specs=pl.BlockSpec((tm, N_out_pad), lambda i: (i, 0)),
        compiler_params=pltpu.CompilerParams(
            dimension_semantics=("parallel",),
        ),
    )(x_pad, *flat_wb)

    return out_pad[:B, :n_classes]


if __name__ == "__main__":
    # Small shapes consistent with the module: image-like input flattened inside forward.
    B, C, H, W = 2, 4, 16, 16
    n_inputs = C * H * W  # 1024
    n_hidden = [32, 32]
    n_classes = 10

    key = jax.random.PRNGKey(0)
    key_x, key_p = jax.random.split(key)
    x = jax.random.normal(key_x, (B, C, H, W), dtype=jnp.float32)

    params = init_mlp_params(key_p, n_inputs, n_hidden, n_classes)
    ws, bs = prepare_params(params, n_inputs)  # one-time, outside hot path

    fwd = jax.jit(
        functools.partial(mlp_pallas_forward, n_classes=n_classes, bf16_matmul=False)
    )
    out = jax.block_until_ready(fwd(x, ws, bs))

    # Pure-JAX reference of the original module's forward (f32, unpadded).
    h_ref = x.reshape(B, -1)
    for i, (w, b) in enumerate(params):
        h_ref = h_ref @ w.T + b
        if i != len(params) - 1:
            h_ref = jnp.where(h_ref > 0, h_ref, jnp.exp(h_ref) - 1.0)  # ELU(alpha=1)

    assert out.shape == (B, n_classes)
    assert jnp.allclose(out, h_ref, atol=1e-5, rtol=1e-5)

    print("KERNEL_OK")
</pallas_src>

<mosaic_0001>
module attributes {stable_mosaic.version = 11 : i64} {
  func.func @_fused_mlp_kernel(%arg0: i32, %arg1: memref<8x1024xf32, #tpu.memory_space<vmem>>, %arg2: memref<1024x128xf32, #tpu.memory_space<vmem>>, %arg3: memref<1x128xf32, #tpu.memory_space<vmem>>, %arg4: memref<128x128xf32, #tpu.memory_space<vmem>>, %arg5: memref<1x128xf32, #tpu.memory_space<vmem>>, %arg6: memref<128x128xf32, #tpu.memory_space<vmem>>, %arg7: memref<1x128xf32, #tpu.memory_space<vmem>>, %arg8: memref<8x128xf32, #tpu.memory_space<vmem>>) attributes {dimension_semantics = [#tpu.dimension_semantics<parallel>], iteration_bounds = array<i64: 1>, scalar_prefetch = 0 : i64, scratch_operands = 0 : i64, tpu.core_type = #tpu.core_type<tc>, window_params = [{transform_indices = @transform_0, window_bounds = array<i64: 8, 1024>}, {pipeline_mode = #tpu.pipeline_mode<synchronous>, transform_indices = @transform_1, window_bounds = array<i64: 1024, 128>}, {pipeline_mode = #tpu.pipeline_mode<synchronous>, transform_indices = @transform_2, window_bounds = array<i64: 1, 128>}, {pipeline_mode = #tpu.pipeline_mode<synchronous>, transform_indices = @transform_3, window_bounds = array<i64: 128, 128>}, {pipeline_mode = #tpu.pipeline_mode<synchronous>, transform_indices = @transform_4, window_bounds = array<i64: 1, 128>}, {pipeline_mode = #tpu.pipeline_mode<synchronous>, transform_indices = @transform_5, window_bounds = array<i64: 128, 128>}, {pipeline_mode = #tpu.pipeline_mode<synchronous>, transform_indices = @transform_6, window_bounds = array<i64: 1, 128>}, {transform_indices = @transform_7, window_bounds = array<i64: 8, 128>}]} {
    %c0 = arith.constant 0 : index
    %c0_0 = arith.constant 0 : index
    %0 = vector.load %arg1[%c0, %c0_0] : memref<8x1024xf32, #tpu.memory_space<vmem>>, vector<8x1024xf32>
    %c0_1 = arith.constant 0 : index
    %c0_2 = arith.constant 0 : index
    %1 = vector.load %arg2[%c0_1, %c0_2] : memref<1024x128xf32, #tpu.memory_space<vmem>>, vector<1024x128xf32>
    %c0_3 = arith.constant 0 : index
    %c0_4 = arith.constant 0 : index
    %2 = vector.load %arg3[%c0_3, %c0_4] : memref<1x128xf32, #tpu.memory_space<vmem>>, vector<1x128xf32>
    %cst = arith.constant dense<0.000000e+00> : vector<8x128xf32>
    %3 = tpu.matmul %0, %1, %cst {dimension_numbers = #tpu.dot_dimension_numbers<[1], [0], [0], [1], [0, 0, 1, 1], [], []>} : vector<8x1024xf32>, vector<1024x128xf32>, vector<8x128xf32> -> vector<8x128xf32>
    %4 = vector.broadcast %2 : vector<1x128xf32> to vector<8x128xf32>
    %5 = arith.addf %3, %4 : vector<8x128xf32>
    %cst_5 = arith.constant 0.000000e+00 : f32
    %6 = vector.broadcast %cst_5 : f32 to vector<8x128xf32>
    %7 = arith.cmpf ogt, %5, %6 : vector<8x128xf32>
    %8 = math.exp %5 : vector<8x128xf32>
    %cst_6 = arith.constant 1.000000e+00 : f32
    %9 = vector.broadcast %cst_6 : f32 to vector<8x128xf32>
    %10 = arith.subf %8, %9 : vector<8x128xf32>
    %11 = arith.select %7, %5, %10 : vector<8x128xi1>, vector<8x128xf32>
    %c0_7 = arith.constant 0 : index
    %c0_8 = arith.constant 0 : index
    %12 = vector.load %arg4[%c0_7, %c0_8] : memref<128x128xf32, #tpu.memory_space<vmem>>, vector<128x128xf32>
    %c0_9 = arith.constant 0 : index
    %c0_10 = arith.constant 0 : index
    %13 = vector.load %arg5[%c0_9, %c0_10] : memref<1x128xf32, #tpu.memory_space<vmem>>, vector<1x128xf32>
    %cst_11 = arith.constant dense<0.000000e+00> : vector<8x128xf32>
    %14 = tpu.matmul %11, %12, %cst_11 {dimension_numbers = #tpu.dot_dimension_numbers<[1], [0], [0], [1], [0, 0, 1, 1], [], []>} : vector<8x128xf32>, vector<128x128xf32>, vector<8x128xf32> -> vector<8x128xf32>
    %15 = vector.broadcast %13 : vector<1x128xf32> to vector<8x128xf32>
    %16 = arith.addf %14, %15 : vector<8x128xf32>
    %cst_12 = arith.constant 0.000000e+00 : f32
    %17 = vector.broadcast %cst_12 : f32 to vector<8x128xf32>
    %18 = arith.cmpf ogt, %16, %17 : vector<8x128xf32>
    %19 = math.exp %16 : vector<8x128xf32>
    %cst_13 = arith.constant 1.000000e+00 : f32
    %20 = vector.broadcast %cst_13 : f32 to vector<8x128xf32>
    %21 = arith.subf %19, %20 : vector<8x128xf32>
    %22 = arith.select %18, %16, %21 : vector<8x128xi1>, vector<8x128xf32>
    %c0_14 = arith.constant 0 : index
    %c0_15 = arith.constant 0 : index
    %23 = vector.load %arg6[%c0_14, %c0_15] : memref<128x128xf32, #tpu.memory_space<vmem>>, vector<128x128xf32>
    %c0_16 = arith.constant 0 : index
    %c0_17 = arith.constant 0 : index
    %24 = vector.load %arg7[%c0_16, %c0_17] : memref<1x128xf32, #tpu.memory_space<vmem>>, vector<1x128xf32>
    %cst_18 = arith.constant dense<0.000000e+00> : vector<8x128xf32>
    %25 = tpu.matmul %22, %23, %cst_18 {dimension_numbers = #tpu.dot_dimension_numbers<[1], [0], [0], [1], [0, 0, 1, 1], [], []>} : vector<8x128xf32>, vector<128x128xf32>, vector<8x128xf32> -> vector<8x128xf32>
    %26 = vector.broadcast %24 : vector<1x128xf32> to vector<8x128xf32>
    %27 = arith.addf %25, %26 : vector<8x128xf32>
    %c0_19 = arith.constant 0 : index
    %c0_20 = arith.constant 0 : index
    %28 = vector.load %arg8[%c0_19, %c0_20] : memref<8x128xf32, #tpu.memory_space<vmem>>, vector<8x128xf32>
    tpu.vector_store %arg8[%c0_19, %c0_20], %27 {strides = array<i32>} : memref<8x128xf32, #tpu.memory_space<vmem>>, vector<8x128xf32>,
    return
  }
  func.func @transform_0(%arg0: i32) -> (i32, i32) {
    %c0_i32 = arith.constant 0 : i32
    %c0_i32_0 = arith.constant 0 : i32
    return %arg0, %c0_i32 : i32, i32
  }
  func.func @transform_1(%arg0: i32) -> (i32, i32) {
    %c0_i32 = arith.constant 0 : i32
    %c0_i32_0 = arith.constant 0 : i32
    %c0_i32_1 = arith.constant 0 : i32
    return %c0_i32, %c0_i32_0 : i32, i32
  }
  func.func @transform_2(%arg0: i32) -> (i32, i32) {
    %c0_i32 = arith.constant 0 : i32
    %c0_i32_0 = arith.constant 0 : i32
    %c0_i32_1 = arith.constant 0 : i32
    return %c0_i32, %c0_i32_0 : i32, i32
  }
  func.func @transform_3(%arg0: i32) -> (i32, i32) {
    %c0_i32 = arith.constant 0 : i32
    %c0_i32_0 = arith.constant 0 : i32
    %c0_i32_1 = arith.constant 0 : i32
    return %c0_i32, %c0_i32_0 : i32, i32
  }
  func.func @transform_4(%arg0: i32) -> (i32, i32) {
    %c0_i32 = arith.constant 0 : i32
    %c0_i32_0 = arith.constant 0 : i32
    %c0_i32_1 = arith.constant 0 : i32
    return %c0_i32, %c0_i32_0 : i32, i32
  }
  func.func @transform_5(%arg0: i32) -> (i32, i32) {
    %c0_i32 = arith.constant 0 : i32
    %c0_i32_0 = arith.constant 0 : i32
    %c0_i32_1 = arith.constant 0 : i32
    return %c0_i32, %c0_i32_0 : i32, i32
  }
  func.func @transform_6(%arg0: i32) -> (i32, i32) {
    %c0_i32 = arith.constant 0 : i32
    %c0_i32_0 = arith.constant 0 : i32
    %c0_i32_1 = arith.constant 0 : i32
    return %c0_i32, %c0_i32_0 : i32, i32
  }
  func.func @transform_7(%arg0: i32) -> (i32, i32) {
    %c0_i32 = arith.constant 0 : i32
    %c0_i32_0 = arith.constant 0 : i32
    return %arg0, %c0_i32 : i32, i32
  }
}

</mosaic_0001>

<llo_original>
// kernel: mlp_pallas_forward.1
$region0: #{mlp_pallas_forward.1}
  #allocation0 [shape = 'u32[]', space=smem, size = 0x4, offset = 0x4, fixed_abs, tag = 'smem constant byte address 0x4 - core index']
  #allocation1 [shape = 'u32[144,128]{1,0:T(1,128)}', space=vmem, size = 0x12000, scoped, tag = 'internal scratch']
  %s0 = inlined_call_operand.vmem [shape: f32[8,1024], index: 0, kind: input, shape index: {}]
  %s1 = inlined_call_operand.hbm [shape: f32[1024,128], index: 1, kind: input, shape index: {}]
  %s2 = inlined_call_operand.vmem [shape: f32[1,128], index: 2, kind: input, shape index: {}]
  %s3 = inlined_call_operand.vmem [shape: f32[128,128], index: 3, kind: input, shape index: {}]
  %s4 = inlined_call_operand.vmem [shape: f32[1,128], index: 4, kind: input, shape index: {}]
  %s5 = inlined_call_operand.hbm [shape: f32[128,128], index: 5, kind: input, shape index: {}]
  %s6 = inlined_call_operand.vmem [shape: f32[1,128], index: 6, kind: input, shape index: {}]
  %s7 = inlined_call_operand.vmem [shape: f32[8,128], index: 7, kind: output, shape index: {}]
  %s8 = sld [smem:[#allocation0]]
  $region46: #{mlp_pallas_forward.1} parent=0
    _
  %s10 = ssub.s32 1, %s8
  %s11 = scalar_select 0, %s10, %s8
  $region1: #{mlp_pallas_forward.1} parent=0
    #allocation2 [shape = 'u8[524288]{0}', space=vmem, size = 0x80000, scoped, tag = 'input window, operand 1, single buffered']
    #allocation3 [shape = 's32[1]{0}', space=sflag, size = 0x4, scoped, tag = 'scoped memory for mlp_pallas_forward.1']
    #allocation4 [shape = 'u8[65536]{0}', space=vmem, size = 0x10000, scoped, tag = 'input window, operand 5, single buffered']
    #allocation5 [shape = 's32[1]{0}', space=sflag, size = 0x4, scoped, tag = 'scoped memory for mlp_pallas_forward.1']
    %12 = vsyncpa [#allocation3], 0
    %13 = vsyncpa [#allocation5], 0
    // Predicated region
    $region2: #{mlp_pallas_forward.1} parent=1 // pred_check
      _
    $region3: #{mlp_pallas_forward.1} parent=1 // pred_check_branch
      %15 = sbr.rel (0) target = $region5
    $region4: #{mlp_pallas_forward.1} parent=1 // pred_region
      _
    $region5: #{mlp_pallas_forward.1} parent=1 // pred_fallthru
      _
    // Predicated region
    $region6: #{mlp_pallas_forward.1} parent=1 // pred_check
      _
    $region7: #{mlp_pallas_forward.1} parent=1 // pred_check_branch
      %17 = sbr.rel (0) target = $region9
    $region8: #{mlp_pallas_forward.1} parent=1 // pred_region
      %s19 = ssub.s32 16384, 16384
      %20 = vsyncadd [#allocation3], %s19
      %s21 = sshll.u32 [#allocation2], 4
      %s22 = int_to_ptr.vmem [resolvable:$true] %s21
      %27 = dma.hbm_to_vmem [thread:$0]  %s1, 16384, %s22, [#allocation3], 128, 128, 8
    $region9: #{mlp_pallas_forward.1} parent=1 // pred_fallthru
      _
    // Predicated region
    $region10: #{mlp_pallas_forward.1} parent=1 // pred_check
      _
    $region11: #{mlp_pallas_forward.1} parent=1 // pred_check_branch
      %29 = sbr.rel (0) target = $region13
    $region12: #{mlp_pallas_forward.1} parent=1 // pred_region
      _
    $region13: #{mlp_pallas_forward.1} parent=1 // pred_fallthru
      _
    // Predicated region
    $region14: #{mlp_pallas_forward.1} parent=1 // pred_check
      _
    $region15: #{mlp_pallas_forward.1} parent=1 // pred_check_branch
      %31 = sbr.rel (0) target = $region17
    $region16: #{mlp_pallas_forward.1} parent=1 // pred_region
      _
    $region17: #{mlp_pallas_forward.1} parent=1 // pred_fallthru
      _
    // Predicated region
    $region18: #{mlp_pallas_forward.1} parent=1 // pred_check
      _
    $region19: #{mlp_pallas_forward.1} parent=1 // pred_check_branch
      %33 = sbr.rel (0) target = $region21
    $region20: #{mlp_pallas_forward.1} parent=1 // pred_region
      _
    $region21: #{mlp_pallas_forward.1} parent=1 // pred_fallthru
      _
    // Predicated region
    $region22: #{mlp_pallas_forward.1} parent=1 // pred_check
      _
    $region23: #{mlp_pallas_forward.1} parent=1 // pred_check_branch
      %35 = sbr.rel (0) target = $region25
    $region24: #{mlp_pallas_forward.1} parent=1 // pred_region
      %s37 = ssub.s32 2048, 2048
      %38 = vsyncadd [#allocation5], %s37
      %s39 = sshll.u32 [#allocation4], 4
      %s40 = int_to_ptr.vmem [resolvable:$true] %s39
      %45 = dma.hbm_to_vmem [thread:$0]  %s5, 2048, %s40, [#allocation5], 128, 128, 8
    $region25: #{mlp_pallas_forward.1} parent=1 // pred_fallthru
      _
    // Predicated region
    $region26: #{mlp_pallas_forward.1} parent=1 // pred_check
      _
    $region27: #{mlp_pallas_forward.1} parent=1 // pred_check_branch
      %47 = sbr.rel (0) target = $region29
    $region28: #{mlp_pallas_forward.1} parent=1 // pred_region
      _
    $region29: #{mlp_pallas_forward.1} parent=1 // pred_fallthru
      _
    // Predicated region
    $region30: #{mlp_pallas_forward.1} parent=1 // pred_check
      _
    $region31: #{mlp_pallas_forward.1} parent=1 // pred_check_branch
      %49 = sbr.rel (0) target = $region33
    $region32: #{mlp_pallas_forward.1} parent=1 // pred_region
      %50 = dma.done [#allocation3], 16384
    $region33: #{mlp_pallas_forward.1} parent=1 // pred_fallthru
      _
    // Predicated region
    $region34: #{mlp_pallas_forward.1} parent=1 // pred_check
      _
    $region35: #{mlp_pallas_forward.1} parent=1 // pred_check_branch
      %52 = sbr.rel (0) target = $region37
    $region36: #{mlp_pallas_forward.1} parent=1 // pred_region
      %53 = dma.done [#allocation5], 2048
    $region37: #{mlp_pallas_forward.1} parent=1 // pred_fallthru
      _
    %v54 = vld [vmem:[%s0] sm:$0xff]
    %v55 = vld [vmem:[%s0 + $0x8] sm:$0xff]
    %v56 = vld [vmem:[%s0 + $0x10] sm:$0xff]
    %v57 = vld [vmem:[%s0 + $0x18] sm:$0xff]
    %v58 = vld [vmem:[%s0 + $0x20] sm:$0xff]
    %v59 = vld [vmem:[%s0 + $0x28] sm:$0xff]
    %v60 = vld [vmem:[%s0 + $0x30] sm:$0xff]
    %v61 = vld [vmem:[%s0 + $0x38] sm:$0xff]
    %v62 = vld [vmem:[#allocation2] sm:$0xff]
    %v63 = vld [vmem:[#allocation2 + $0x8] sm:$0xff]
    %v64 = vld [vmem:[#allocation2 + $0x10] sm:$0xff]
    %v65 = vld [vmem:[#allocation2 + $0x18] sm:$0xff]
    %v66 = vld [vmem:[#allocation2 + $0x20] sm:$0xff]
    %v67 = vld [vmem:[#allocation2 + $0x28] sm:$0xff]
    %v68 = vld [vmem:[#allocation2 + $0x30] sm:$0xff]
    %v69 = vld [vmem:[#allocation2 + $0x38] sm:$0xff]
    %v70 = vld [vmem:[#allocation2 + $0x40] sm:$0xff]
    %v71 = vld [vmem:[#allocation2 + $0x48] sm:$0xff]
    %v72 = vld [vmem:[#allocation2 + $0x50] sm:$0xff]
    %v73 = vld [vmem:[#allocation2 + $0x58] sm:$0xff]
    %v74 = vld [vmem:[#allocation2 + $0x60] sm:$0xff]
    %v75 = vld [vmem:[#allocation2 + $0x68] sm:$0xff]
    %v76 = vld [vmem:[#allocation2 + $0x70] sm:$0xff]
    %v77 = vld [vmem:[#allocation2 + $0x78] sm:$0xff]
    %v78 = vld [vmem:[#allocation2 + $0x80] sm:$0xff]
    %v79 = vld [vmem:[#allocation2 + $0x88] sm:$0xff]
    %v80 = vld [vmem:[#allocation2 + $0x90] sm:$0xff]
    %v81 = vld [vmem:[#allocation2 + $0x98] sm:$0xff]
    %v82 = vld [vmem:[#allocation2 + $0xa0] sm:$0xff]
    %v83 = vld [vmem:[#allocation2 + $0xa8] sm:$0xff]
    %v84 = vld [vmem:[#allocation2 + $0xb0] sm:$0xff]
    %v85 = vld [vmem:[#allocation2 + $0xb8] sm:$0xff]
    %v86 = vld [vmem:[#allocation2 + $0xc0] sm:$0xff]
    %v87 = vld [vmem:[#allocation2 + $0xc8] sm:$0xff]
    %v88 = vld [vmem:[#allocation2 + $0xd0] sm:$0xff]
    %v89 = vld [vmem:[#allocation2 + $0xd8] sm:$0xff]
    %v90 = vld [vmem:[#allocation2 + $0xe0] sm:$0xff]
    %v91 = vld [vmem:[#allocation2 + $0xe8] sm:$0xff]
    %v92 = vld [vmem:[#allocation2 + $0xf0] sm:$0xff]
    %v93 = vld [vmem:[#allocation2 + $0xf8] sm:$0xff]
    %v94 = vld [vmem:[#allocation2 + $0x100] sm:$0xff]
    %v95 = vld [vmem:[#allocation2 + $0x108] sm:$0xff]
    %v96 = vld [vmem:[#allocation2 + $0x110] sm:$0xff]
    %v97 = vld [vmem:[#allocation2 + $0x118] sm:$0xff]
    %v98 = vld [vmem:[#allocation2 + $0x120] sm:$0xff]
    %v99 = vld [vmem:[#allocation2 + $0x128] sm:$0xff]
    %v100 = vld [vmem:[#allocation2 + $0x130] sm:$0xff]
    %v101 = vld [vmem:[#allocation2 + $0x138] sm:$0xff]
    %v102 = vld [vmem:[#allocation2 + $0x140] sm:$0xff]
    %v103 = vld [vmem:[#allocation2 + $0x148] sm:$0xff]
    %v104 = vld [vmem:[#allocation2 + $0x150] sm:$0xff]
    %v105 = vld [vmem:[#allocation2 + $0x158] sm:$0xff]
    %v106 = vld [vmem:[#allocation2 + $0x160] sm:$0xff]
    %v107 = vld [vmem:[#allocation2 + $0x168] sm:$0xff]
    %v108 = vld [vmem:[#allocation2 + $0x170] sm:$0xff]
    %v109 = vld [vmem:[#allocation2 + $0x178] sm:$0xff]
    %v110 = vld [vmem:[#allocation2 + $0x180] sm:$0xff]
    %v111 = vld [vmem:[#allocation2 + $0x188] sm:$0xff]
    %v112 = vld [vmem:[#allocation2 + $0x190] sm:$0xff]
    %v113 = vld [vmem:[#allocation2 + $0x198] sm:$0xff]
    %v114 = vld [vmem:[#allocation2 + $0x1a0] sm:$0xff]
    %v115 = vld [vmem:[#allocation2 + $0x1a8] sm:$0xff]
    %v116 = vld [vmem:[#allocation2 + $0x1b0] sm:$0xff]
    %v117 = vld [vmem:[#allocation2 + $0x1b8] sm:$0xff]
    %v118 = vld [vmem:[#allocation2 + $0x1c0] sm:$0xff]
    %v119 = vld [vmem:[#allocation2 + $0x1c8] sm:$0xff]
    %v120 = vld [vmem:[#allocation2 + $0x1d0] sm:$0xff]
    %v121 = vld [vmem:[#allocation2 + $0x1d8] sm:$0xff]
    %v122 = vld [vmem:[#allocation2 + $0x1e0] sm:$0xff]
    %v123 = vld [vmem:[#allocation2 + $0x1e8] sm:$0xff]
    %v124 = vld [vmem:[#allocation2 + $0x1f0] sm:$0xff]
    %v125 = vld [vmem:[#allocation2 + $0x1f8] sm:$0xff]
    %v126 = vld [vmem:[#allocation2 + $0x200] sm:$0xff]
    %v127 = vld [vmem:[#allocation2 + $0x208] sm:$0xff]
    %v128 = vld [vmem:[#allocation2 + $0x210] sm:$0xff]
    %v129 = vld [vmem:[#allocation2 + $0x218] sm:$0xff]
    %v130 = vld [vmem:[#allocation2 + $0x220] sm:$0xff]
    %v131 = vld [vmem:[#allocation2 + $0x228] sm:$0xff]
    %v132 = vld [vmem:[#allocation2 + $0x230] sm:$0xff]
    %v133 = vld [vmem:[#allocation2 + $0x238] sm:$0xff]
    %v134 = vld [vmem:[#allocation2 + $0x240] sm:$0xff]
    %v135 = vld [vmem:[#allocation2 + $0x248] sm:$0xff]
    %v136 = vld [vmem:[#allocation2 + $0x250] sm:$0xff]
    %v137 = vld [vmem:[#allocation2 + $0x258] sm:$0xff]
    %v138 = vld [vmem:[#allocation2 + $0x260] sm:$0xff]
    %v139 = vld [vmem:[#allocation2 + $0x268] sm:$0xff]
    %v140 = vld [vmem:[#allocation2 + $0x270] sm:$0xff]
    %v141 = vld [vmem:[#allocation2 + $0x278] sm:$0xff]
    %v142 = vld [vmem:[#allocation2 + $0x280] sm:$0xff]
    %v143 = vld [vmem:[#allocation2 + $0x288] sm:$0xff]
    %v144 = vld [vmem:[#allocation2 + $0x290] sm:$0xff]
    %v145 = vld [vmem:[#allocation2 + $0x298] sm:$0xff]
    %v146 = vld [vmem:[#allocation2 + $0x2a0] sm:$0xff]
    %v147 = vld [vmem:[#allocation2 + $0x2a8] sm:$0xff]
    %v148 = vld [vmem:[#allocation2 + $0x2b0] sm:$0xff]
    %v149 = vld [vmem:[#allocation2 + $0x2b8] sm:$0xff]
    %v150 = vld [vmem:[#allocation2 + $0x2c0] sm:$0xff]
    %v151 = vld [vmem:[#allocation2 + $0x2c8] sm:$0xff]
    %v152 = vld [vmem:[#allocation2 + $0x2d0] sm:$0xff]
    %v153 = vld [vmem:[#allocation2 + $0x2d8] sm:$0xff]
    %v154 = vld [vmem:[#allocation2 + $0x2e0] sm:$0xff]
    %v155 = vld [vmem:[#allocation2 + $0x2e8] sm:$0xff]
    %v156 = vld [vmem:[#allocation2 + $0x2f0] sm:$0xff]
    %v157 = vld [vmem:[#allocation2 + $0x2f8] sm:$0xff]
    %v158 = vld [vmem:[#allocation2 + $0x300] sm:$0xff]
    %v159 = vld [vmem:[#allocation2 + $0x308] sm:$0xff]
    %v160 = vld [vmem:[#allocation2 + $0x310] sm:$0xff]
    %v161 = vld [vmem:[#allocation2 + $0x318] sm:$0xff]
    %v162 = vld [vmem:[#allocation2 + $0x320] sm:$0xff]
    %v163 = vld [vmem:[#allocation2 + $0x328] sm:$0xff]
    %v164 = vld [vmem:[#allocation2 + $0x330] sm:$0xff]
    %v165 = vld [vmem:[#allocation2 + $0x338] sm:$0xff]
    %v166 = vld [vmem:[#allocation2 + $0x340] sm:$0xff]
    %v167 = vld [vmem:[#allocation2 + $0x348] sm:$0xff]
    %v168 = vld [vmem:[#allocation2 + $0x350] sm:$0xff]
    %v169 = vld [vmem:[#allocation2 + $0x358] sm:$0xff]
    %v170 = vld [vmem:[#allocation2 + $0x360] sm:$0xff]
    %v171 = vld [vmem:[#allocation2 + $0x368] sm:$0xff]
    %v172 = vld [vmem:[#allocation2 + $0x370] sm:$0xff]
    %v173 = vld [vmem:[#allocation2 + $0x378] sm:$0xff]
    %v174 = vld [vmem:[#allocation2 + $0x380] sm:$0xff]
    %v175 = vld [vmem:[#allocation2 + $0x388] sm:$0xff]
    %v176 = vld [vmem:[#allocation2 + $0x390] sm:$0xff]
    %v177 = vld [vmem:[#allocation2 + $0x398] sm:$0xff]
    %v178 = vld [vmem:[#allocation2 + $0x3a0] sm:$0xff]
    %v179 = vld [vmem:[#allocation2 + $0x3a8] sm:$0xff]
    %v180 = vld [vmem:[#allocation2 + $0x3b0] sm:$0xff]
    %v181 = vld [vmem:[#allocation2 + $0x3b8] sm:$0xff]
    %v182 = vld [vmem:[#allocation2 + $0x3c0] sm:$0xff]
    %v183 = vld [vmem:[#allocation2 + $0x3c8] sm:$0xff]
    %v184 = vld [vmem:[#allocation2 + $0x3d0] sm:$0xff]
    %v185 = vld [vmem:[#allocation2 + $0x3d8] sm:$0xff]
    %v186 = vld [vmem:[#allocation2 + $0x3e0] sm:$0xff]
    %v187 = vld [vmem:[#allocation2 + $0x3e8] sm:$0xff]
    %v188 = vld [vmem:[#allocation2 + $0x3f0] sm:$0xff]
    %v189 = vld [vmem:[#allocation2 + $0x3f8] sm:$0xff]
    %v190 = vld [vmem:[%s2] sm:$0x1]
    %v192 = vlaneseq
    %v193 = vshrl.u32 %v192, 7
    %v194 = vsub.s32 0, %v193
    %v195 = vrot.slane %v190, %v194
    %197 = vmatprep.subr.mxu0 0.0
    %198 = vmatpush1.msra.mxu0 %v62
    %199 = vmatprep.subr.mxu0 0.0
    %200 = vmatpush1.msra.mxu0 %v63
    %201 = vmatprep.subr.mxu0 0.0
    %202 = vmatpush1.msra.mxu0 %v64
    %203 = vmatprep.subr.mxu0 0.0
    %204 = vmatpush1.msra.mxu0 %v65
    %205 = vmatprep.subr.mxu0 0.0
    %206 = vmatpush1.msra.mxu0 %v66
    %207 = vmatprep.subr.mxu0 0.0
    %208 = vmatpush1.msra.mxu0 %v67
    %209 = vmatprep.subr.mxu0 0.0
    %210 = vmatpush1.msra.mxu0 %v68
    %211 = vmatprep.subr.mxu0 0.0
    %212 = vmatpush1.msra.mxu0 %v69
    %213 = vmatprep.subr.mxu0 0.0
    %214 = vmatpush1.msra.mxu0 %v70
    %215 = vmatprep.subr.mxu0 0.0
    %216 = vmatpush1.msra.mxu0 %v71
    %217 = vmatprep.subr.mxu0 0.0
    %218 = vmatpush1.msra.mxu0 %v72
    %219 = vmatprep.subr.mxu0 0.0
    %220 = vmatpush1.msra.mxu0 %v73
    %221 = vmatprep.subr.mxu0 0.0
    %222 = vmatpush1.msra.mxu0 %v74
    %223 = vmatprep.subr.mxu0 0.0
    %224 = vmatpush1.msra.mxu0 %v75
    %225 = vmatprep.subr.mxu0 0.0
    %226 = vmatpush1.msra.mxu0 %v76
    %227 = vmatprep.subr.mxu0 0.0
    %228 = vmatpush1.msra.mxu0 %v77
    %229 = vmatprep.subr.mxu0 0.0
    %230 = vmatpush1.msra.mxu0 %v78
    %231 = vmatprep.subr.mxu0 0.0
    %232 = vmatpush1.msra.mxu0 %v79
    %233 = vmatprep.subr.mxu0 0.0
    %234 = vmatpush1.msra.mxu0 %v80
    %235 = vmatprep.subr.mxu0 0.0
    %236 = vmatpush1.msra.mxu0 %v81
    %237 = vmatprep.subr.mxu0 0.0
    %238 = vmatpush1.msra.mxu0 %v82
    %239 = vmatprep.subr.mxu0 0.0
    %240 = vmatpush1.msra.mxu0 %v83
    %241 = vmatprep.subr.mxu0 0.0
    %242 = vmatpush1.msra.mxu0 %v84
    %243 = vmatprep.subr.mxu0 0.0
    %244 = vmatpush1.msra.mxu0 %v85
    %245 = vmatprep.subr.mxu0 0.0
    %246 = vmatpush1.msra.mxu0 %v86
    %247 = vmatprep.subr.mxu0 0.0
    %248 = vmatpush1.msra.mxu0 %v87
    %249 = vmatprep.subr.mxu0 0.0
    %250 = vmatpush1.msra.mxu0 %v88
    %251 = vmatprep.subr.mxu0 0.0
    %252 = vmatpush1.msra.mxu0 %v89
    %253 = vmatprep.subr.mxu0 0.0
    %254 = vmatpush1.msra.mxu0 %v90
    %255 = vmatprep.subr.mxu0 0.0
    %256 = vmatpush1.msra.mxu0 %v91
    %257 = vmatprep.subr.mxu0 0.0
    %258 = vmatpush1.msra.mxu0 %v92
    %259 = vmatprep.subr.mxu0 0.0
    %260 = vmatpush1.msra.mxu0 %v93
    %261 = vmatprep.mubr.f32.mxu0 %v55
    %262 = vmatmul.mubr.f32.gmra.mrb[0].mxu0 %v54
    %v263 = vpop.f32.mrb[0].mxu0
    %v264 = vadd.f32 %v195, %v263
    %v265 = vpop.f32.mrb[0].mxu0
    %266 = vdwg.mxu0
    %267 = vmatprep.subr.mxu0 0.0
    %268 = vmatpush1.msra.mxu0 %v94
    %269 = vmatprep.subr.mxu0 0.0
    %270 = vmatpush1.msra.mxu0 %v95
    %271 = vmatprep.subr.mxu0 0.0
    %272 = vmatpush1.msra.mxu0 %v96
    %273 = vmatprep.subr.mxu0 0.0
    %274 = vmatpush1.msra.mxu0 %v97
    %275 = vmatprep.subr.mxu0 0.0
    %276 = vmatpush1.msra.mxu0 %v98
    %277 = vmatprep.subr.mxu0 0.0
    %278 = vmatpush1.msra.mxu0 %v99
    %279 = vmatprep.subr.mxu0 0.0
    %280 = vmatpush1.msra.mxu0 %v100
    %281 = vmatprep.subr.mxu0 0.0
    %282 = vmatpush1.msra.mxu0 %v101
    %283 = vmatprep.subr.mxu0 0.0
    %284 = vmatpush1.msra.mxu0 %v102
    %285 = vmatprep.subr.mxu0 0.0
    %286 = vmatpush1.msra.mxu0 %v103
    %287 = vmatprep.subr.mxu0 0.0
    %288 = vmatpush1.msra.mxu0 %v104
    %289 = vmatprep.subr.mxu0 0.0
    %290 = vmatpush1.msra.mxu0 %v105
    %291 = vmatprep.subr.mxu0 0.0
    %292 = vmatpush1.msra.mxu0 %v106
    %293 = vmatprep.subr.mxu0 0.0
    %294 = vmatpush1.msra.mxu0 %v107
    %295 = vmatprep.subr.mxu0 0.0
    %296 = vmatpush1.msra.mxu0 %v108
    %297 = vmatprep.subr.mxu0 0.0
    %298 = vmatpush1.msra.mxu0 %v109
    %299 = vmatprep.subr.mxu0 0.0
    %300 = vmatpush1.msra.mxu0 %v110
    %301 = vmatprep.subr.mxu0 0.0
    %302 = vmatpush1.msra.mxu0 %v111
    %303 = vmatprep.subr.mxu0 0.0
    %304 = vmatpush1.msra.mxu0 %v112
    %305 = vmatprep.subr.mxu0 0.0
    %306 = vmatpush1.msra.mxu0 %v113
    %307 = vmatprep.subr.mxu0 0.0
    %308 = vmatpush1.msra.mxu0 %v114
    %309 = vmatprep.subr.mxu0 0.0
    %310 = vmatpush1.msra.mxu0 %v115
    %311 = vmatprep.subr.mxu0 0.0
    %312 = vmatpush1.msra.mxu0 %v116
    %313 = vmatprep.subr.mxu0 0.0
    %314 = vmatpush1.msra.mxu0 %v117
    %315 = vmatprep.subr.mxu0 0.0
    %316 = vmatpush1.msra.mxu0 %v118
    %317 = vmatprep.subr.mxu0 0.0
    %318 = vmatpush1.msra.mxu0 %v119
    %319 = vmatprep.subr.mxu0 0.0
    %320 = vmatpush1.msra.mxu0 %v120
    %321 = vmatprep.subr.mxu0 0.0
    %322 = vmatpush1.msra.mxu0 %v121
    %323 = vmatprep.subr.mxu0 0.0
    %324 = vmatpush1.msra.mxu0 %v122
    %325 = vmatprep.subr.mxu0 0.0
    %326 = vmatpush1.msra.mxu0 %v123
    %327 = vmatprep.subr.mxu0 0.0
    %328 = vmatpush1.msra.mxu0 %v124
    %329 = vmatprep.subr.mxu0 0.0
    %330 = vmatpush1.msra.mxu0 %v125
    %331 = vmatprep.mubr.f32.mxu0 %v57
    %332 = vmatmul.mubr.f32.gmra.mrb[0].mxu0 %v56
    %v333 = vpop.f32.mrb[0].mxu0
    %v334 = vadd.f32 %v264, %v333
    %v335 = vpop.f32.mrb[0].mxu0
    %336 = vdwg.mxu0
    %337 = vmatprep.subr.mxu0 0.0
    %338 = vmatpush1.msra.mxu0 %v126
    %339 = vmatprep.subr.mxu0 0.0
    %340 = vmatpush1.msra.mxu0 %v127
    %341 = vmatprep.subr.mxu0 0.0
    %342 = vmatpush1.msra.mxu0 %v128
    %343 = vmatprep.subr.mxu0 0.0
    %344 = vmatpush1.msra.mxu0 %v129
    %345 = vmatprep.subr.mxu0 0.0
    %346 = vmatpush1.msra.mxu0 %v130
    %347 = vmatprep.subr.mxu0 0.0
    %348 = vmatpush1.msra.mxu0 %v131
    %349 = vmatprep.subr.mxu0 0.0
    %350 = vmatpush1.msra.mxu0 %v132
    %351 = vmatprep.subr.mxu0 0.0
    %352 = vmatpush1.msra.mxu0 %v133
    %353 = vmatprep.subr.mxu0 0.0
    %354 = vmatpush1.msra.mxu0 %v134
    %355 = vmatprep.subr.mxu0 0.0
    %356 = vmatpush1.msra.mxu0 %v135
    %357 = vmatprep.subr.mxu0 0.0
    %358 = vmatpush1.msra.mxu0 %v136
    %359 = vmatprep.subr.mxu0 0.0
    %360 = vmatpush1.msra.mxu0 %v137
    %361 = vmatprep.subr.mxu0 0.0
    %362 = vmatpush1.msra.mxu0 %v138
    %363 = vmatprep.subr.mxu0 0.0
    %364 = vmatpush1.msra.mxu0 %v139
    %365 = vmatprep.subr.mxu0 0.0
    %366 = vmatpush1.msra.mxu0 %v140
    %367 = vmatprep.subr.mxu0 0.0
    %368 = vmatpush1.msra.mxu0 %v141
    %369 = vmatprep.subr.mxu0 0.0
    %370 = vmatpush1.msra.mxu0 %v142
    %371 = vmatprep.subr.mxu0 0.0
    %372 = vmatpush1.msra.mxu0 %v143
    %373 = vmatprep.subr.mxu0 0.0
    %374 = vmatpush1.msra.mxu0 %v144
    %375 = vmatprep.subr.mxu0 0.0
    %376 = vmatpush1.msra.mxu0 %v145
    %377 = vmatprep.subr.mxu0 0.0
    %378 = vmatpush1.msra.mxu0 %v146
    %379 = vmatprep.subr.mxu0 0.0
    %380 = vmatpush1.msra.mxu0 %v147
    %381 = vmatprep.subr.mxu0 0.0
    %382 = vmatpush1.msra.mxu0 %v148
    %383 = vmatprep.subr.mxu0 0.0
    %384 = vmatpush1.msra.mxu0 %v149
    %385 = vmatprep.subr.mxu0 0.0
    %386 = vmatpush1.msra.mxu0 %v150
    %387 = vmatprep.subr.mxu0 0.0
    %388 = vmatpush1.msra.mxu0 %v151
    %389 = vmatprep.subr.mxu0 0.0
    %390 = vmatpush1.msra.mxu0 %v152
    %391 = vmatprep.subr.mxu0 0.0
    %392 = vmatpush1.msra.mxu0 %v153
    %393 = vmatprep.subr.mxu0 0.0
    %394 = vmatpush1.msra.mxu0 %v154
    %395 = vmatprep.subr.mxu0 0.0
    %396 = vmatpush1.msra.mxu0 %v155
    %397 = vmatprep.subr.mxu0 0.0
    %398 = vmatpush1.msra.mxu0 %v156
    %399 = vmatprep.subr.mxu0 0.0
    %400 = vmatpush1.msra.mxu0 %v157
    %401 = vmatprep.mubr.f32.mxu0 %v59
    %402 = vmatmul.mubr.f32.gmra.mrb[0].mxu0 %v58
    %v403 = vpop.f32.mrb[0].mxu0
    %v404 = vadd.f32 %v334, %v403
    %v405 = vpop.f32.mrb[0].mxu0
    %406 = vdwg.mxu0
    %407 = vmatprep.subr.mxu0 0.0
    %408 = vmatpush1.msra.mxu0 %v158
    %409 = vmatprep.subr.mxu0 0.0
    %410 = vmatpush1.msra.mxu0 %v159
    %411 = vmatprep.subr.mxu0 0.0
    %412 = vmatpush1.msra.mxu0 %v160
    %413 = vmatprep.subr.mxu0 0.0
    %414 = vmatpush1.msra.mxu0 %v161
    %415 = vmatprep.subr.mxu0 0.0
    %416 = vmatpush1.msra.mxu0 %v162
    %417 = vmatprep.subr.mxu0 0.0
    %418 = vmatpush1.msra.mxu0 %v163
    %419 = vmatprep.subr.mxu0 0.0
    %420 = vmatpush1.msra.mxu0 %v164
    %421 = vmatprep.subr.mxu0 0.0
    %422 = vmatpush1.msra.mxu0 %v165
    %423 = vmatprep.subr.mxu0 0.0
    %424 = vmatpush1.msra.mxu0 %v166
    %425 = vmatprep.subr.mxu0 0.0
    %426 = vmatpush1.msra.mxu0 %v167
    %427 = vmatprep.subr.mxu0 0.0
    %428 = vmatpush1.msra.mxu0 %v168
    %429 = vmatprep.subr.mxu0 0.0
    %430 = vmatpush1.msra.mxu0 %v169
    %431 = vmatprep.subr.mxu0 0.0
    %432 = vmatpush1.msra.mxu0 %v170
    %433 = vmatprep.subr.mxu0 0.0
    %434 = vmatpush1.msra.mxu0 %v171
    %435 = vmatprep.subr.mxu0 0.0
    %436 = vmatpush1.msra.mxu0 %v172
    %437 = vmatprep.subr.mxu0 0.0
    %438 = vmatpush1.msra.mxu0 %v173
    %439 = vmatprep.subr.mxu0 0.0
    %440 = vmatpush1.msra.mxu0 %v174
    %441 = vmatprep.subr.mxu0 0.0
    %442 = vmatpush1.msra.mxu0 %v175
    %443 = vmatprep.subr.mxu0 0.0
    %444 = vmatpush1.msra.mxu0 %v176
    %445 = vmatprep.subr.mxu0 0.0
    %446 = vmatpush1.msra.mxu0 %v177
    %447 = vmatprep.subr.mxu0 0.0
    %448 = vmatpush1.msra.mxu0 %v178
    %449 = vmatprep.subr.mxu0 0.0
    %450 = vmatpush1.msra.mxu0 %v179
    %451 = vmatprep.subr.mxu0 0.0
    %452 = vmatpush1.msra.mxu0 %v180
    %453 = vmatprep.subr.mxu0 0.0
    %454 = vmatpush1.msra.mxu0 %v181
    %455 = vmatprep.subr.mxu0 0.0
    %456 = vmatpush1.msra.mxu0 %v182
    %457 = vmatprep.subr.mxu0 0.0
    %458 = vmatpush1.msra.mxu0 %v183
    %459 = vmatprep.subr.mxu0 0.0
    %460 = vmatpush1.msra.mxu0 %v184
    %461 = vmatprep.subr.mxu0 0.0
    %462 = vmatpush1.msra.mxu0 %v185
    %463 = vmatprep.subr.mxu0 0.0
    %464 = vmatpush1.msra.mxu0 %v186
    %465 = vmatprep.subr.mxu0 0.0
    %466 = vmatpush1.msra.mxu0 %v187
    %467 = vmatprep.subr.mxu0 0.0
    %468 = vmatpush1.msra.mxu0 %v188
    %469 = vmatprep.subr.mxu0 0.0
    %470 = vmatpush1.msra.mxu0 %v189
    %471 = vmatprep.mubr.f32.mxu0 %v61
    %472 = vmatmul.mubr.f32.gmra.mrb[0].mxu0 %v60
    %v473 = vpop.f32.mrb[0].mxu0
    %v474 = vadd.f32 %v404, %v473
    %v475 = vpop.f32.mrb[0].mxu0
    %476 = vdwg.mxu0
    %vm477 = vcmp.gt.f32.partialorder %v474, 0.0
    %v478 = vmul.f32 %v474, 1.442695
    %v479 = vpow.pop %v478
    %v480 = vsub.f32 %v479, 1.0
    %v481 = vsel %vm477, %v474, %v480
    %v482 = vld [vmem:[%s3] sm:$0xff]
    %v483 = vld [vmem:[%s3 + $0x8] sm:$0xff]
    %v484 = vld [vmem:[%s3 + $0x10] sm:$0xff]
    %v485 = vld [vmem:[%s3 + $0x18] sm:$0xff]
    %v486 = vld [vmem:[%s3 + $0x20] sm:$0xff]
    %v487 = vld [vmem:[%s3 + $0x28] sm:$0xff]
    %v488 = vld [vmem:[%s3 + $0x30] sm:$0xff]
    %v489 = vld [vmem:[%s3 + $0x38] sm:$0xff]
    %v490 = vld [vmem:[%s3 + $0x40] sm:$0xff]
    %v491 = vld [vmem:[%s3 + $0x48] sm:$0xff]
    %v492 = vld [vmem:[%s3 + $0x50] sm:$0xff]
    %v493 = vld [vmem:[%s3 + $0x58] sm:$0xff]
    %v494 = vld [vmem:[%s3 + $0x60] sm:$0xff]
    %v495 = vld [vmem:[%s3 + $0x68] sm:$0xff]
    %v496 = vld [vmem:[%s3 + $0x70] sm:$0xff]
    %v497 = vld [vmem:[%s3 + $0x78] sm:$0xff]
    %v498 = vld [vmem:[%s4] sm:$0x1]
    %v500 = vlaneseq
    %v501 = vshrl.u32 %v500, 7
    %v502 = vsub.s32 0, %v501
    %v503 = vrot.slane %v498, %v502
    %505 = vmatprep.subr.mxu0 0.0
    %506 = vmatpush1.msra.mxu0 %v482
    %507 = vmatprep.subr.mxu0 0.0
    %508 = vmatpush1.msra.mxu0 %v483
    %509 = vmatprep.subr.mxu0 0.0
    %510 = vmatpush1.msra.mxu0 %v484
    %511 = vmatprep.subr.mxu0 0.0
    %512 = vmatpush1.msra.mxu0 %v485
    %513 = vmatprep.subr.mxu0 0.0
    %514 = vmatpush1.msra.mxu0 %v486
    %515 = vmatprep.subr.mxu0 0.0
    %516 = vmatpush1.msra.mxu0 %v487
    %517 = vmatprep.subr.mxu0 0.0
    %518 = vmatpush1.msra.mxu0 %v488
    %519 = vmatprep.subr.mxu0 0.0
    %520 = vmatpush1.msra.mxu0 %v489
    %521 = vmatprep.subr.mxu0 0.0
    %522 = vmatpush1.msra.mxu0 %v490
    %523 = vmatprep.subr.mxu0 0.0
    %524 = vmatpush1.msra.mxu0 %v491
    %525 = vmatprep.subr.mxu0 0.0
    %526 = vmatpush1.msra.mxu0 %v492
    %527 = vmatprep.subr.mxu0 0.0
    %528 = vmatpush1.msra.mxu0 %v493
    %529 = vmatprep.subr.mxu0 0.0
    %530 = vmatpush1.msra.mxu0 %v494
    %531 = vmatprep.subr.mxu0 0.0
    %532 = vmatpush1.msra.mxu0 %v495
    %533 = vmatprep.subr.mxu0 0.0
    %534 = vmatpush1.msra.mxu0 %v496
    %535 = vmatprep.subr.mxu0 0.0
    %536 = vmatpush1.msra.mxu0 %v497
    %537 = vmatprep.subr.mxu0 0.0
    %538 = vmatpush1.msra.mxu0 0.0
    %539 = vmatprep.subr.mxu0 0.0
    %540 = vmatpush1.msra.mxu0 0.0
    %541 = vmatprep.subr.mxu0 0.0
    %542 = vmatpush1.msra.mxu0 0.0
    %543 = vmatprep.subr.mxu0 0.0
    %544 = vmatpush1.msra.mxu0 0.0
    %545 = vmatprep.subr.mxu0 0.0
    %546 = vmatpush1.msra.mxu0 0.0
    %547 = vmatprep.subr.mxu0 0.0
    %548 = vmatpush1.msra.mxu0 0.0
    %549 = vmatprep.subr.mxu0 0.0
    %550 = vmatpush1.msra.mxu0 0.0
    %551 = vmatprep.subr.mxu0 0.0
    %552 = vmatpush1.msra.mxu0 0.0
    %553 = vmatprep.subr.mxu0 0.0
    %554 = vmatpush1.msra.mxu0 0.0
    %555 = vmatprep.subr.mxu0 0.0
    %556 = vmatpush1.msra.mxu0 0.0
    %557 = vmatprep.subr.mxu0 0.0
    %558 = vmatpush1.msra.mxu0 0.0
    %559 = vmatprep.subr.mxu0 0.0
    %560 = vmatpush1.msra.mxu0 0.0
    %561 = vmatprep.subr.mxu0 0.0
    %562 = vmatpush1.msra.mxu0 0.0
    %563 = vmatprep.subr.mxu0 0.0
    %564 = vmatpush1.msra.mxu0 0.0
    %565 = vmatprep.subr.mxu0 0.0
    %566 = vmatpush1.msra.mxu0 0.0
    %567 = vmatprep.subr.mxu0 0.0
    %568 = vmatpush1.msra.mxu0 0.0
    %569 = vmatprep.mubr.f32.mxu0 0.0
    %570 = vmatmul.mubr.f32.gmra.mrb[0].mxu0 %v481
    %v571 = vpop.f32.mrb[0].mxu0
    %v572 = vadd.f32 %v503, %v571
    %v573 = vpop.f32.mrb[0].mxu0
    %574 = vdwg.mxu0
    %vm575 = vcmp.gt.f32.partialorder %v572, 0.0
    %v576 = vmul.f32 %v572, 1.442695
    %v577 = vpow.pop %v576
    %v578 = vsub.f32 %v577, 1.0
    %v579 = vsel %vm575, %v572, %v578
    %v580 = vld [vmem:[#allocation4] sm:$0xff]
    %v581 = vld [vmem:[#allocation4 + $0x8] sm:$0xff]
    %v582 = vld [vmem:[#allocation4 + $0x10] sm:$0xff]
    %v583 = vld [vmem:[#allocation4 + $0x18] sm:$0xff]
    %v584 = vld [vmem:[#allocation4 + $0x20] sm:$0xff]
    %v585 = vld [vmem:[#allocation4 + $0x28] sm:$0xff]
    %v586 = vld [vmem:[#allocation4 + $0x30] sm:$0xff]
    %v587 = vld [vmem:[#allocation4 + $0x38] sm:$0xff]
    %v588 = vld [vmem:[#allocation4 + $0x40] sm:$0xff]
    %v589 = vld [vmem:[#allocation4 + $0x48] sm:$0xff]
    %v590 = vld [vmem:[#allocation4 + $0x50] sm:$0xff]
    %v591 = vld [vmem:[#allocation4 + $0x58] sm:$0xff]
    %v592 = vld [vmem:[#allocation4 + $0x60] sm:$0xff]
    %v593 = vld [vmem:[#allocation4 + $0x68] sm:$0xff]
    %v594 = vld [vmem:[#allocation4 + $0x70] sm:$0xff]
    %v595 = vld [vmem:[#allocation4 + $0x78] sm:$0xff]
    %v596 = vld [vmem:[%s6] sm:$0x1]
    %v598 = vlaneseq
    %v599 = vshrl.u32 %v598, 7
    %v600 = vsub.s32 0, %v599
    %v601 = vrot.slane %v596, %v600
    %603 = vmatprep.subr.mxu0 0.0
    %604 = vmatpush1.msra.mxu0 %v580
    %605 = vmatprep.subr.mxu0 0.0
    %606 = vmatpush1.msra.mxu0 %v581
    %607 = vmatprep.subr.mxu0 0.0
    %608 = vmatpush1.msra.mxu0 %v582
    %609 = vmatprep.subr.mxu0 0.0
    %610 = vmatpush1.msra.mxu0 %v583
    %611 = vmatprep.subr.mxu0 0.0
    %612 = vmatpush1.msra.mxu0 %v584
    %613 = vmatprep.subr.mxu0 0.0
    %614 = vmatpush1.msra.mxu0 %v585
    %615 = vmatprep.subr.mxu0 0.0
    %616 = vmatpush1.msra.mxu0 %v586
    %617 = vmatprep.subr.mxu0 0.0
    %618 = vmatpush1.msra.mxu0 %v587
    %619 = vmatprep.subr.mxu0 0.0
    %620 = vmatpush1.msra.mxu0 %v588
    %621 = vmatprep.subr.mxu0 0.0
    %622 = vmatpush1.msra.mxu0 %v589
    %623 = vmatprep.subr.mxu0 0.0
    %624 = vmatpush1.msra.mxu0 %v590
    %625 = vmatprep.subr.mxu0 0.0
    %626 = vmatpush1.msra.mxu0 %v591
    %627 = vmatprep.subr.mxu0 0.0
    %628 = vmatpush1.msra.mxu0 %v592
    %629 = vmatprep.subr.mxu0 0.0
    %630 = vmatpush1.msra.mxu0 %v593
    %631 = vmatprep.subr.mxu0 0.0
    %632 = vmatpush1.msra.mxu0 %v594
    %633 = vmatprep.subr.mxu0 0.0
    %634 = vmatpush1.msra.mxu0 %v595
    %635 = vmatprep.subr.mxu0 0.0
    %636 = vmatpush1.msra.mxu0 0.0
    %637 = vmatprep.subr.mxu0 0.0
    %638 = vmatpush1.msra.mxu0 0.0
    %639 = vmatprep.subr.mxu0 0.0
    %640 = vmatpush1.msra.mxu0 0.0
    %641 = vmatprep.subr.mxu0 0.0
    %642 = vmatpush1.msra.mxu0 0.0
    %643 = vmatprep.subr.mxu0 0.0
    %644 = vmatpush1.msra.mxu0 0.0
    %645 = vmatprep.subr.mxu0 0.0
    %646 = vmatpush1.msra.mxu0 0.0
    %647 = vmatprep.subr.mxu0 0.0
    %648 = vmatpush1.msra.mxu0 0.0
    %649 = vmatprep.subr.mxu0 0.0
    %650 = vmatpush1.msra.mxu0 0.0
    %651 = vmatprep.subr.mxu0 0.0
    %652 = vmatpush1.msra.mxu0 0.0
    %653 = vmatprep.subr.mxu0 0.0
    %654 = vmatpush1.msra.mxu0 0.0
    %655 = vmatprep.subr.mxu0 0.0
    %656 = vmatpush1.msra.mxu0 0.0
    %657 = vmatprep.subr.mxu0 0.0
    %658 = vmatpush1.msra.mxu0 0.0
    %659 = vmatprep.subr.mxu0 0.0
    %660 = vmatpush1.msra.mxu0 0.0
    %661 = vmatprep.subr.mxu0 0.0
    %662 = vmatpush1.msra.mxu0 0.0
    %663 = vmatprep.subr.mxu0 0.0
    %664 = vmatpush1.msra.mxu0 0.0
    %665 = vmatprep.subr.mxu0 0.0
    %666 = vmatpush1.msra.mxu0 0.0
    %667 = vmatprep.mubr.f32.mxu0 0.0
    %668 = vmatmul.mubr.f32.gmra.mrb[0].mxu0 %v579
    %v669 = vpop.f32.mrb[0].mxu0
    %v670 = vadd.f32 %v601, %v669
    %v671 = vpop.f32.mrb[0].mxu0
    %672 = vdwg.mxu0
    %673 = vst [vmem:[%s7] sm:$0xff] %v670
    // Predicated region
    $region38: #{mlp_pallas_forward.1} parent=1 // pred_check
      _
    $region39: #{mlp_pallas_forward.1} parent=1 // pred_check_branch
      %675 = sbr.rel (0) target = $region41
    $region40: #{mlp_pallas_forward.1} parent=1 // pred_region
      _
    $region41: #{mlp_pallas_forward.1} parent=1 // pred_fallthru
      _
    // Predicated region
    $region42: #{mlp_pallas_forward.1} parent=1 // pred_check
      _
    $region43: #{mlp_pallas_forward.1} parent=1 // pred_check_branch
      %677 = sbr.rel (0) target = $region45
    $region44: #{mlp_pallas_forward.1} parent=1 // pred_region
      _
    $region45: #{mlp_pallas_forward.1} parent=1 // pred_fallthru
      _
    %678 = vsyncpa [#allocation3], 1
    %679 = vsyncpa [#allocation5], 1

</llo_original>
